<compile_context>
chip_gen: v5e
topology: v5e:2x2
jax: 0.10.0
libtpu: 0.0.40
codegen_flags: <defaults>
</compile_context>

<pallas_src>
import functools

import jax
import jax.numpy as jnp
from jax import lax
from jax.experimental import pallas as pl
from jax.experimental.pallas import tpu as pltpu


def _inattention_kernel(seed_ref, alpha_ref, x_ref, w_ref, b_ref, o_ref, *,
                        num_stacks, channels, dropout_prob, tile_hw, nb,
                        hw_total, use_hw_prng, bf16_sigmoid):
    """One grid step: nb images x one (C, tile_hw) spatial tile each.

    x_ref : (nb, C, tile_hw)   model dtype (bf16 or f32)
    w_ref : (S*C, C)           model dtype (all S 1x1 convs fused, resident)
    b_ref : (S*C, 1)           f32 (resident)
    """
    sc = num_stacks * channels
    n = pl.program_id(0)
    j = pl.program_id(1)

    w = w_ref[...]                                   # (S*C, C), model dtype
    b = b_ref[...]                                   # (S*C, 1), f32

    inv_keep = jnp.float32(1.0 / (1.0 - dropout_prob))
    # Fold the 2^24 uniform scale into the Bernoulli-threshold constants
    # (removes one full (S*C, T) multiply per tile).
    c1 = jnp.float32((1.0 - dropout_prob) * (1 << 24))
    c0 = jnp.float32(dropout_prob * (1 << 24))

    if use_hw_prng:
        # One seed per grid step; per-image draws continue the stream.
        pltpu.prng_seed(seed_ref[0], n * pl.num_programs(1) + j)

    for bidx in range(nb):                           # static unroll, nb small
        x_b = x_ref[bidx]                            # (C, tile_hw), model dtype

        # All S 1x1 convs as a single MXU matmul (model dtype in, f32 acc).
        logits = jnp.dot(w, x_b, preferred_element_type=jnp.float32) + b

        if bf16_sigmoid:
            # v6e/v7x: EUP has bf16 -> roughly 2x sigmoid throughput on the
            # 3x-volume (S*C, T) burst. (Not used on v5e.)
            sig = jax.nn.sigmoid(logits.astype(jnp.bfloat16)).astype(jnp.float32)
        else:
            sig = jax.nn.sigmoid(logits)
        thr = sig * c1 + c0                          # threshold in [0, 2^24]

        if use_hw_prng:
            raw = pltpu.prng_random_bits((sc, tile_hw))
            bits = raw if raw.dtype == jnp.uint32 else pltpu.bitcast(raw, jnp.uint32)
        else:
            # Portable counter-hash PRNG (interpret mode / non-TPU backends).
            rows = lax.broadcasted_iota(jnp.uint32, (sc, tile_hw), 0)
            cols = lax.broadcasted_iota(jnp.uint32, (sc, tile_hw), 1)
            g = (n * jnp.int32(nb) + jnp.int32(bidx)).astype(jnp.uint32)
            ctr = (g * jnp.uint32(sc) + rows) * jnp.uint32(hw_total) \
                + j.astype(jnp.uint32) * jnp.uint32(tile_hw) + cols
            h = ctr ^ (seed_ref[0].astype(jnp.uint32) * jnp.uint32(0x9E3779B9))
            h = h ^ (h >> 16)
            h = h * jnp.uint32(0x7FEB352D)
            h = h ^ (h >> 15)
            h = h * jnp.uint32(0x846CA68B)
            h = h ^ (h >> 16)
            bits = h

        u24 = (bits >> 8).astype(jnp.float32)        # 24-bit uniforms
        keep = u24 < thr                             # Bernoulli(sig*(1-p)+p)

        # out = x/(1-p) * prod_k where(keep_k, 1, 1-alpha_k)
        # Fold 1/(1-p) into the k=0 select constants (saves a (C,T) multiply).
        x_f = x_b.astype(jnp.float32)
        a0 = alpha_ref[0]
        result = x_f * jnp.where(keep[0:channels], inv_keep,
                                 (1.0 - a0) * inv_keep)
        for k in range(1, num_stacks):
            a_k = alpha_ref[k]
            result = result * jnp.where(keep[k * channels:(k + 1) * channels],
                                        1.0, 1.0 - a_k)
        o_ref[bidx] = result.astype(o_ref.dtype)


def _vmem_limit_for_device():
    """Per-generation scoped-VMEM limit + whether bf16 EUP sigmoid is worth it."""
    kind = ""
    try:
        kind = jax.devices()[0].device_kind.lower()
    except Exception:
        pass
    if "v5" in kind:
        return 64 << 20, False   # 128 MiB physical, 16 MiB scoped default; no bf16 EUP
    if "v6" in kind:
        return 64 << 20, True    # 128 MiB physical; raise the 32 MiB scoped default
    if "7" in kind:
        return 40 << 20, True    # only 64 MiB physical per TC -> leave headroom
    return 32 << 20, True        # unknown / interpret: conservative


def _step_vmem_bytes(nb, c_pad, s, t_hw, xbytes):
    """Rough per-grid-step VMEM footprint (double-buffered I/O + live temps)."""
    stream = 2 * 2 * nb * c_pad * t_hw * xbytes               # x + out, double-buffered
    temps = (4 * s * c_pad + 2 * c_pad) * 4 * t_hw            # logits/thr/bits/keep + x_f/result
    resident = 2 * (s * c_pad * c_pad * xbytes + s * c_pad * 4) + (64 << 10)
    return stream + temps + resident


def _choose_tiling(N, hw_pad, c_pad, s, xbytes, vmem_budget):
    """Pick (nb, tile_hw): biggest 128-multiple spatial tile that fits the
    budget, then bundle batch images per step when blocks would be tiny."""
    m = hw_pad // 128
    t_hw = 128
    for d in range(1, m + 1):
        if m % d:
            continue
        t = 128 * d
        if _step_vmem_bytes(1, c_pad, s, t, xbytes) <= vmem_budget:
            t_hw = max(t_hw, t)
    nb = 1
    if t_hw == hw_pad:
        target = 1 << 20                                        # ~1 MiB of x per step
        for cand in range(2, min(N, 8) + 1):                    # cap the static unroll
            if N % cand:
                continue
            if _step_vmem_bytes(cand, c_pad, s, t_hw, xbytes) > vmem_budget:
                break
            nb = cand
            if cand * c_pad * t_hw * xbytes >= target:
                break
    return nb, t_hw


def inattention_dropout(x_nchw, weights, biases, alpha, seed, dropout_prob=0.2,
                        *, training=True, use_hw_prng=None):
    """x_nchw: (N, C, H, W). weights: (S, C_out, C_in) 1x1-conv kernels.
    biases: (S, C_out). alpha: (S,) raw params (softmax applied here). seed: int.
    """
    if not training or dropout_prob == 0:
        return x_nchw                                   # identity, like the module

    if use_hw_prng is None:
        use_hw_prng = jax.default_backend() == "tpu"    # HW PRNG only lowers on TPU

    N, C, H, W = x_nchw.shape
    S = weights.shape[0]
    HW = H * W

    vmem_limit, bf16_sig = _vmem_limit_for_device()
    vmem_budget = int(vmem_limit * 0.6)                 # headroom for compiler scratch

    xbytes = jnp.dtype(x_nchw.dtype).itemsize
    # Pad channels to a multiple of 8 (sublane-aligned keep slices) and the
    # spatial axis to a multiple of 128 (lane-dense loads/stores).
    c_pad = -(-C // 8) * 8
    hw_pad = -(-HW // 128) * 128

    nb, t_hw = _choose_tiling(N, hw_pad, c_pad, S, xbytes, vmem_budget)

    # NCHW-native: (N, C, H*W) reshape is free (no transposes around the kernel).
    x3 = x_nchw.reshape(N, C, HW)
    if c_pad != C or hw_pad != HW:
        x3 = jnp.pad(x3, ((0, 0), (0, c_pad - C), (0, hw_pad - HW)))

    w_p, b_p = weights, biases
    if c_pad != C:
        w_p = jnp.pad(weights, ((0, 0), (0, c_pad - C), (0, c_pad - C)))
        b_p = jnp.pad(biases, ((0, 0), (0, c_pad - C)))
    # Keep weights in the model dtype (bf16 stays bf16: single-pass MXU, half traffic).
    w_all = w_p.reshape(S * c_pad, c_pad).astype(x_nchw.dtype)
    b_all = b_p.reshape(S * c_pad, 1).astype(jnp.float32)
    alpha_norm = jax.nn.softmax(alpha.astype(jnp.float32))
    seed_arr = jnp.asarray([seed], dtype=jnp.int32)

    kernel = functools.partial(
        _inattention_kernel, num_stacks=S, channels=c_pad,
        dropout_prob=float(dropout_prob), tile_hw=t_hw, nb=nb,
        hw_total=hw_pad, use_hw_prng=use_hw_prng, bf16_sigmoid=bf16_sig)

    out3 = pl.pallas_call(
        kernel,
        out_shape=jax.ShapeDtypeStruct((N, c_pad, hw_pad), x_nchw.dtype),
        grid=(N // nb, hw_pad // t_hw),
        in_specs=[
            pl.BlockSpec(memory_space=pltpu.MemorySpace.SMEM),         # seed (1,)
            pl.BlockSpec(memory_space=pltpu.MemorySpace.SMEM),         # alpha_norm (S,)
            pl.BlockSpec((nb, c_pad, t_hw), lambda n, j: (n, 0, j)),   # x tile
            pl.BlockSpec((S * c_pad, c_pad), lambda n, j: (0, 0)),     # fused weights (resident)
            pl.BlockSpec((S * c_pad, 1), lambda n, j: (0, 0)),         # fused biases (resident)
        ],
        out_specs=pl.BlockSpec((nb, c_pad, t_hw), lambda n, j: (n, 0, j)),
        compiler_params=pltpu.CompilerParams(
            dimension_semantics=("parallel", "parallel"),
            vmem_limit_bytes=vmem_limit),
    )(seed_arr, alpha_norm, x3, w_all, b_all)

    if c_pad != C or hw_pad != HW:
        out3 = out3[:, :C, :HW]
    return out3.reshape(N, C, H, W)


if __name__ == "__main__":
    # Small deterministic example consistent with the module's forward.
    batch, channels, height, width = 2, 8, 16, 16
    num_stacks, dropout_prob = 3, 0.2

    key = jax.random.PRNGKey(0)
    kx, kw, kb = jax.random.split(key, 3)

    x = jax.random.normal(kx, (batch, channels, height, width), dtype=jnp.float32)
    # Synthetic parameters (shapes from nn.Conv2d(C, C, 1) per stack).
    weights = 0.1 * jax.random.normal(kw, (num_stacks, channels, channels),
                                      dtype=jnp.float32)          # (S, C_out, C_in)
    biases = 0.05 * jax.random.normal(kb, (num_stacks, channels), dtype=jnp.float32)
    alpha = jnp.ones((num_stacks,), dtype=jnp.float32) / num_stacks

    out = inattention_dropout(x, weights, biases, alpha, seed=0,
                              dropout_prob=dropout_prob)
    out = jax.block_until_ready(out)

    assert out.shape == x.shape and out.dtype == x.dtype
    assert bool(jnp.all(jnp.isfinite(out)))
    # Eval path must be the identity.
    out_eval = inattention_dropout(x, weights, biases, alpha, seed=0,
                                   dropout_prob=dropout_prob, training=False)
    assert bool(jnp.all(out_eval == x))
    print("KERNEL_OK")
</pallas_src>

<mosaic_0001>
module attributes {stable_mosaic.version = 11 : i64} {
  func.func @_inattention_kernel(%arg0: i32, %arg1: i32, %arg2: memref<1xi32, #tpu.memory_space<smem>>, %arg3: memref<3xf32, #tpu.memory_space<smem>>, %arg4: memref<2x8x256xf32, #tpu.memory_space<vmem>>, %arg5: memref<24x8xf32, #tpu.memory_space<vmem>>, %arg6: memref<24x1xf32, #tpu.memory_space<vmem>>, %arg7: memref<2x8x256xf32, #tpu.memory_space<vmem>>) attributes {dimension_semantics = [#tpu.dimension_semantics<parallel>, #tpu.dimension_semantics<parallel>], iteration_bounds = array<i64: 1, 1>, scalar_prefetch = 0 : i64, scratch_operands = 0 : i64, tpu.core_type = #tpu.core_type<tc>, window_params = [{transform_indices = @transform_0, window_bounds = array<i64: 1>}, {transform_indices = @transform_1, window_bounds = array<i64: 3>}, {transform_indices = @transform_2, window_bounds = array<i64: 2, 8, 256>}, {pipeline_mode = #tpu.pipeline_mode<synchronous>, transform_indices = @transform_3, window_bounds = array<i64: 24, 8>}, {pipeline_mode = #tpu.pipeline_mode<synchronous>, transform_indices = @transform_4, window_bounds = array<i64: 24, 1>}, {transform_indices = @transform_5, window_bounds = array<i64: 2, 8, 256>}]} {
    %c0 = arith.constant 0 : index
    %c0_0 = arith.constant 0 : index
    %0 = vector.load %arg5[%c0, %c0_0] : memref<24x8xf32, #tpu.memory_space<vmem>>, vector<24x8xf32>
    %c0_1 = arith.constant 0 : index
    %c0_2 = arith.constant 0 : index
    %1 = vector.load %arg6[%c0_1, %c0_2] : memref<24x1xf32, #tpu.memory_space<vmem>>, vector<24x1xf32>
    %c0_3 = arith.constant 0 : index
    %c0_4 = arith.constant 0 : index
    %c0_5 = arith.constant 0 : index
    %2 = vector.load %arg4[%c0_3, %c0_4, %c0_5] : memref<2x8x256xf32, #tpu.memory_space<vmem>>, vector<1x8x256xf32>
    %3 = vector.shape_cast %2 : vector<1x8x256xf32> to vector<8x256xf32>
    %cst = arith.constant dense<0.000000e+00> : vector<24x256xf32>
    %4 = tpu.matmul %0, %3, %cst {dimension_numbers = #tpu.dot_dimension_numbers<[1], [0], [0], [1], [0, 0, 1, 1], [], []>} : vector<24x8xf32>, vector<8x256xf32>, vector<24x256xf32> -> vector<24x256xf32>
    %5 = vector.broadcast %1 : vector<24x1xf32> to vector<24x256xf32>
    %6 = arith.addf %4, %5 : vector<24x256xf32>
    %7 = arith.truncf %6 : vector<24x256xf32> to vector<24x256xbf16>
    %8 = arith.negf %7 : vector<24x256xbf16>
    %9 = math.exp %8 : vector<24x256xbf16>
    %cst_6 = arith.constant 1.000000e+00 : bf16
    %10 = vector.broadcast %cst_6 : bf16 to vector<24x256xbf16>
    %11 = arith.addf %10, %9 : vector<24x256xbf16>
    %12 = arith.divf %10, %11 : vector<24x256xbf16>
    %13 = arith.extf %12 : vector<24x256xbf16> to vector<24x256xf32>
    %cst_7 = arith.constant 0x4B4CCCCD : f32
    %14 = vector.broadcast %cst_7 : f32 to vector<24x256xf32>
    %15 = arith.mulf %13, %14 : vector<24x256xf32>
    %cst_8 = arith.constant 3355443.25 : f32
    %16 = vector.broadcast %cst_8 : f32 to vector<24x256xf32>
    %17 = arith.addf %15, %16 : vector<24x256xf32>
    %18 = tpu.iota {dimensions = array<i32: 0>} : vector<24x256xi32>
    %19 = tpu.iota {dimensions = array<i32: 1>} : vector<24x256xi32>
    %c2_i32 = arith.constant 2 : i32
    %20 = arith.muli %arg0, %c2_i32 : i32
    %c0_i32 = arith.constant 0 : i32
    %21 = arith.addi %20, %c0_i32 : i32
    %c24_i32 = arith.constant 24 : i32
    %22 = arith.muli %21, %c24_i32 : i32
    %23 = vector.broadcast %22 : i32 to vector<24x256xi32>
    %24 = arith.addi %23, %18 : vector<24x256xi32>
    %c256_i32 = arith.constant 256 : i32
    %25 = vector.broadcast %c256_i32 : i32 to vector<24x256xi32>
    %26 = arith.muli %24, %25 : vector<24x256xi32>
    %c256_i32_9 = arith.constant 256 : i32
    %27 = arith.muli %arg1, %c256_i32_9 : i32
    %28 = vector.broadcast %27 : i32 to vector<24x256xi32>
    %29 = arith.addi %26, %28 : vector<24x256xi32>
    %30 = arith.addi %29, %19 : vector<24x256xi32>
    %c0_10 = arith.constant 0 : index
    %31 = memref.load %arg2[%c0_10] : memref<1xi32, #tpu.memory_space<smem>>
    %c-1640531527_i32 = arith.constant -1640531527 : i32
    %32 = arith.muli %31, %c-1640531527_i32 : i32
    %33 = vector.broadcast %32 : i32 to vector<24x256xi32>
    %34 = arith.xori %30, %33 : vector<24x256xi32>
    %c16_i32 = arith.constant 16 : i32
    %35 = vector.broadcast %c16_i32 : i32 to vector<24x256xi32>
    %36 = arith.shrui %34, %35 : vector<24x256xi32>
    %37 = arith.xori %34, %36 : vector<24x256xi32>
    %c2146121005_i32 = arith.constant 2146121005 : i32
    %38 = vector.broadcast %c2146121005_i32 : i32 to vector<24x256xi32>
    %39 = arith.muli %37, %38 : vector<24x256xi32>
    %c15_i32 = arith.constant 15 : i32
    %40 = vector.broadcast %c15_i32 : i32 to vector<24x256xi32>
    %41 = arith.shrui %39, %40 : vector<24x256xi32>
    %42 = arith.xori %39, %41 : vector<24x256xi32>
    %c-2073254261_i32 = arith.constant -2073254261 : i32
    %43 = vector.broadcast %c-2073254261_i32 : i32 to vector<24x256xi32>
    %44 = arith.muli %42, %43 : vector<24x256xi32>
    %c16_i32_11 = arith.constant 16 : i32
    %45 = vector.broadcast %c16_i32_11 : i32 to vector<24x256xi32>
    %46 = arith.shrui %44, %45 : vector<24x256xi32>
    %47 = arith.xori %44, %46 : vector<24x256xi32>
    %c8_i32 = arith.constant 8 : i32
    %48 = vector.broadcast %c8_i32 : i32 to vector<24x256xi32>
    %49 = arith.shrui %47, %48 : vector<24x256xi32>
    %50 = arith.uitofp %49 : vector<24x256xi32> to vector<24x256xf32>
    %51 = arith.cmpf olt, %50, %17 : vector<24x256xf32>
    %c0_12 = arith.constant 0 : index
    %52 = memref.load %arg3[%c0_12] : memref<3xf32, #tpu.memory_space<smem>>
    %53 = vector.extract_strided_slice %51 {offsets = [0, 0], sizes = [8, 256], strides = [1, 1]} : vector<24x256xi1> to vector<8x256xi1>
    %cst_13 = arith.constant 1.000000e+00 : f32
    %54 = arith.subf %cst_13, %52 : f32
    %cst_14 = arith.constant 1.250000e+00 : f32
    %55 = arith.mulf %54, %cst_14 : f32
    %cst_15 = arith.constant 1.250000e+00 : f32
    %56 = vector.broadcast %cst_15 : f32 to vector<8x256xf32>
    %57 = vector.broadcast %55 : f32 to vector<8x256xf32>
    %58 = arith.select %53, %56, %57 : vector<8x256xi1>, vector<8x256xf32>
    %59 = arith.mulf %3, %58 : vector<8x256xf32>
    %c1 = arith.constant 1 : index
    %60 = memref.load %arg3[%c1] : memref<3xf32, #tpu.memory_space<smem>>
    %61 = vector.extract_strided_slice %51 {offsets = [8, 0], sizes = [8, 256], strides = [1, 1]} : vector<24x256xi1> to vector<8x256xi1>
    %cst_16 = arith.constant 1.000000e+00 : f32
    %62 = arith.subf %cst_16, %60 : f32
    %cst_17 = arith.constant 1.000000e+00 : f32
    %63 = vector.broadcast %cst_17 : f32 to vector<8x256xf32>
    %64 = vector.broadcast %62 : f32 to vector<8x256xf32>
    %65 = arith.select %61, %63, %64 : vector<8x256xi1>, vector<8x256xf32>
    %66 = arith.mulf %59, %65 : vector<8x256xf32>
    %c2 = arith.constant 2 : index
    %67 = memref.load %arg3[%c2] : memref<3xf32, #tpu.memory_space<smem>>
    %68 = vector.extract_strided_slice %51 {offsets = [16, 0], sizes = [8, 256], strides = [1, 1]} : vector<24x256xi1> to vector<8x256xi1>
    %cst_18 = arith.constant 1.000000e+00 : f32
    %69 = arith.subf %cst_18, %67 : f32
    %cst_19 = arith.constant 1.000000e+00 : f32
    %70 = vector.broadcast %cst_19 : f32 to vector<8x256xf32>
    %71 = vector.broadcast %69 : f32 to vector<8x256xf32>
    %72 = arith.select %68, %70, %71 : vector<8x256xi1>, vector<8x256xf32>
    %73 = arith.mulf %66, %72 : vector<8x256xf32>
    %c0_20 = arith.constant 0 : index
    %c0_21 = arith.constant 0 : index
    %c0_22 = arith.constant 0 : index
    %74 = vector.load %arg7[%c0_20, %c0_21, %c0_22] : memref<2x8x256xf32, #tpu.memory_space<vmem>>, vector<1x8x256xf32>
    %75 = vector.shape_cast %74 : vector<1x8x256xf32> to vector<8x256xf32>
    %76 = vector.shape_cast %73 : vector<8x256xf32> to vector<1x8x256xf32>
    tpu.vector_store %arg7[%c0_20, %c0_21, %c0_22], %76 {strides = array<i32>} : memref<2x8x256xf32, #tpu.memory_space<vmem>>, vector<1x8x256xf32>,
    %c1_23 = arith.constant 1 : index
    %c0_24 = arith.constant 0 : index
    %c0_25 = arith.constant 0 : index
    %77 = vector.load %arg4[%c1_23, %c0_24, %c0_25] : memref<2x8x256xf32, #tpu.memory_space<vmem>>, vector<1x8x256xf32>
    %78 = vector.shape_cast %77 : vector<1x8x256xf32> to vector<8x256xf32>
    %cst_26 = arith.constant dense<0.000000e+00> : vector<24x256xf32>
    %79 = tpu.matmul %0, %78, %cst_26 {dimension_numbers = #tpu.dot_dimension_numbers<[1], [0], [0], [1], [0, 0, 1, 1], [], []>} : vector<24x8xf32>, vector<8x256xf32>, vector<24x256xf32> -> vector<24x256xf32>
    %80 = vector.broadcast %1 : vector<24x1xf32> to vector<24x256xf32>
    %81 = arith.addf %79, %80 : vector<24x256xf32>
    %82 = arith.truncf %81 : vector<24x256xf32> to vector<24x256xbf16>
    %83 = arith.negf %82 : vector<24x256xbf16>
    %84 = math.exp %83 : vector<24x256xbf16>
    %cst_27 = arith.constant 1.000000e+00 : bf16
    %85 = vector.broadcast %cst_27 : bf16 to vector<24x256xbf16>
    %86 = arith.addf %85, %84 : vector<24x256xbf16>
    %87 = arith.divf %85, %86 : vector<24x256xbf16>
    %88 = arith.extf %87 : vector<24x256xbf16> to vector<24x256xf32>
    %cst_28 = arith.constant 0x4B4CCCCD : f32
    %89 = vector.broadcast %cst_28 : f32 to vector<24x256xf32>
    %90 = arith.mulf %88, %89 : vector<24x256xf32>
    %cst_29 = arith.constant 3355443.25 : f32
    %91 = vector.broadcast %cst_29 : f32 to vector<24x256xf32>
    %92 = arith.addf %90, %91 : vector<24x256xf32>
    %93 = tpu.iota {dimensions = array<i32: 0>} : vector<24x256xi32>
    %94 = tpu.iota {dimensions = array<i32: 1>} : vector<24x256xi32>
    %c2_i32_30 = arith.constant 2 : i32
    %95 = arith.muli %arg0, %c2_i32_30 : i32
    %c1_i32 = arith.constant 1 : i32
    %96 = arith.addi %95, %c1_i32 : i32
    %c24_i32_31 = arith.constant 24 : i32
    %97 = arith.muli %96, %c24_i32_31 : i32
    %98 = vector.broadcast %97 : i32 to vector<24x256xi32>
    %99 = arith.addi %98, %93 : vector<24x256xi32>
    %c256_i32_32 = arith.constant 256 : i32
    %100 = vector.broadcast %c256_i32_32 : i32 to vector<24x256xi32>
    %101 = arith.muli %99, %100 : vector<24x256xi32>
    %c256_i32_33 = arith.constant 256 : i32
    %102 = arith.muli %arg1, %c256_i32_33 : i32
    %103 = vector.broadcast %102 : i32 to vector<24x256xi32>
    %104 = arith.addi %101, %103 : vector<24x256xi32>
    %105 = arith.addi %104, %94 : vector<24x256xi32>
    %c0_34 = arith.constant 0 : index
    %106 = memref.load %arg2[%c0_34] : memref<1xi32, #tpu.memory_space<smem>>
    %c-1640531527_i32_35 = arith.constant -1640531527 : i32
    %107 = arith.muli %106, %c-1640531527_i32_35 : i32
    %108 = vector.broadcast %107 : i32 to vector<24x256xi32>
    %109 = arith.xori %105, %108 : vector<24x256xi32>
    %c16_i32_36 = arith.constant 16 : i32
    %110 = vector.broadcast %c16_i32_36 : i32 to vector<24x256xi32>
    %111 = arith.shrui %109, %110 : vector<24x256xi32>
    %112 = arith.xori %109, %111 : vector<24x256xi32>
    %c2146121005_i32_37 = arith.constant 2146121005 : i32
    %113 = vector.broadcast %c2146121005_i32_37 : i32 to vector<24x256xi32>
    %114 = arith.muli %112, %113 : vector<24x256xi32>
    %c15_i32_38 = arith.constant 15 : i32
    %115 = vector.broadcast %c15_i32_38 : i32 to vector<24x256xi32>
    %116 = arith.shrui %114, %115 : vector<24x256xi32>
    %117 = arith.xori %114, %116 : vector<24x256xi32>
    %c-2073254261_i32_39 = arith.constant -2073254261 : i32
    %118 = vector.broadcast %c-2073254261_i32_39 : i32 to vector<24x256xi32>
    %119 = arith.muli %117, %118 : vector<24x256xi32>
    %c16_i32_40 = arith.constant 16 : i32
    %120 = vector.broadcast %c16_i32_40 : i32 to vector<24x256xi32>
    %121 = arith.shrui %119, %120 : vector<24x256xi32>
    %122 = arith.xori %119, %121 : vector<24x256xi32>
    %c8_i32_41 = arith.constant 8 : i32
    %123 = vector.broadcast %c8_i32_41 : i32 to vector<24x256xi32>
    %124 = arith.shrui %122, %123 : vector<24x256xi32>
    %125 = arith.uitofp %124 : vector<24x256xi32> to vector<24x256xf32>
    %126 = arith.cmpf olt, %125, %92 : vector<24x256xf32>
    %c0_42 = arith.constant 0 : index
    %127 = memref.load %arg3[%c0_42] : memref<3xf32, #tpu.memory_space<smem>>
    %128 = vector.extract_strided_slice %126 {offsets = [0, 0], sizes = [8, 256], strides = [1, 1]} : vector<24x256xi1> to vector<8x256xi1>
    %cst_43 = arith.constant 1.000000e+00 : f32
    %129 = arith.subf %cst_43, %127 : f32
    %cst_44 = arith.constant 1.250000e+00 : f32
    %130 = arith.mulf %129, %cst_44 : f32
    %cst_45 = arith.constant 1.250000e+00 : f32
    %131 = vector.broadcast %cst_45 : f32 to vector<8x256xf32>
    %132 = vector.broadcast %130 : f32 to vector<8x256xf32>
    %133 = arith.select %128, %131, %132 : vector<8x256xi1>, vector<8x256xf32>
    %134 = arith.mulf %78, %133 : vector<8x256xf32>
    %c1_46 = arith.constant 1 : index
    %135 = memref.load %arg3[%c1_46] : memref<3xf32, #tpu.memory_space<smem>>
    %136 = vector.extract_strided_slice %126 {offsets = [8, 0], sizes = [8, 256], strides = [1, 1]} : vector<24x256xi1> to vector<8x256xi1>
    %cst_47 = arith.constant 1.000000e+00 : f32
    %137 = arith.subf %cst_47, %135 : f32
    %cst_48 = arith.constant 1.000000e+00 : f32
    %138 = vector.broadcast %cst_48 : f32 to vector<8x256xf32>
    %139 = vector.broadcast %137 : f32 to vector<8x256xf32>
    %140 = arith.select %136, %138, %139 : vector<8x256xi1>, vector<8x256xf32>
    %141 = arith.mulf %134, %140 : vector<8x256xf32>
    %c2_49 = arith.constant 2 : index
    %142 = memref.load %arg3[%c2_49] : memref<3xf32, #tpu.memory_space<smem>>
    %143 = vector.extract_strided_slice %126 {offsets = [16, 0], sizes = [8, 256], strides = [1, 1]} : vector<24x256xi1> to vector<8x256xi1>
    %cst_50 = arith.constant 1.000000e+00 : f32
    %144 = arith.subf %cst_50, %142 : f32
    %cst_51 = arith.constant 1.000000e+00 : f32
    %145 = vector.broadcast %cst_51 : f32 to vector<8x256xf32>
    %146 = vector.broadcast %144 : f32 to vector<8x256xf32>
    %147 = arith.select %143, %145, %146 : vector<8x256xi1>, vector<8x256xf32>
    %148 = arith.mulf %141, %147 : vector<8x256xf32>
    %c1_52 = arith.constant 1 : index
    %c0_53 = arith.constant 0 : index
    %c0_54 = arith.constant 0 : index
    %149 = vector.load %arg7[%c1_52, %c0_53, %c0_54] : memref<2x8x256xf32, #tpu.memory_space<vmem>>, vector<1x8x256xf32>
    %150 = vector.shape_cast %149 : vector<1x8x256xf32> to vector<8x256xf32>
    %151 = vector.shape_cast %148 : vector<8x256xf32> to vector<1x8x256xf32>
    tpu.vector_store %arg7[%c1_52, %c0_53, %c0_54], %151 {strides = array<i32>} : memref<2x8x256xf32, #tpu.memory_space<vmem>>, vector<1x8x256xf32>,
    return
  }
  func.func @transform_0(%arg0: i32, %arg1: i32) -> i32 {
    %c0_i32 = arith.constant 0 : i32
    %c0_i32_0 = arith.constant 0 : i32
    return %c0_i32 : i32
  }
  func.func @transform_1(%arg0: i32, %arg1: i32) -> i32 {
    %c0_i32 = arith.constant 0 : i32
    %c0_i32_0 = arith.constant 0 : i32
    return %c0_i32 : i32
  }
  func.func @transform_2(%arg0: i32, %arg1: i32) -> (i32, i32, i32) {
    %c0_i32 = arith.constant 0 : i32
    %c0_i32_0 = arith.constant 0 : i32
    return %arg0, %c0_i32, %arg1 : i32, i32, i32
  }
  func.func @transform_3(%arg0: i32, %arg1: i32) -> (i32, i32) {
    %c0_i32 = arith.constant 0 : i32
    %c0_i32_0 = arith.constant 0 : i32
    %c0_i32_1 = arith.constant 0 : i32
    return %c0_i32, %c0_i32_0 : i32, i32
  }
  func.func @transform_4(%arg0: i32, %arg1: i32) -> (i32, i32) {
    %c0_i32 = arith.constant 0 : i32
    %c0_i32_0 = arith.constant 0 : i32
    %c0_i32_1 = arith.constant 0 : i32
    return %c0_i32, %c0_i32_0 : i32, i32
  }
  func.func @transform_5(%arg0: i32, %arg1: i32) -> (i32, i32, i32) {
    %c0_i32 = arith.constant 0 : i32
    %c0_i32_0 = arith.constant 0 : i32
    return %arg0, %c0_i32, %arg1 : i32, i32, i32
  }
}

</mosaic_0001>

<llo_original>
// kernel: tpu_custom_call.1
$region0: #{tpu_custom_call.1}
  #allocation0 [shape = 'u32[]', space=smem, size = 0x4, offset = 0x4, fixed_abs, tag = 'smem constant byte address 0x4 - core index']
  #allocation1 [shape = 'u32[72,128]{1,0:T(1,128)}', space=vmem, size = 0x9000, scoped, tag = 'internal scratch']
  #allocation2 [shape = 's32[1]{0:T(128)S(6)}', space=smem, size = 0x200, scoped, tag = 'scoped memory for tpu_custom_call.1']
  %s0 = inlined_call_operand.<no memory space> [shape: s32[1], index: 0, kind: input, shape index: {}]
  %s1 = inlined_call_operand.vmem [shape: f32[3], index: 1, kind: input, shape index: {}]
  %s2 = inlined_call_operand.vmem [shape: f32[2,8,256], index: 2, kind: input, shape index: {}]
  %s3 = inlined_call_operand.vmem [shape: f32[24,8], index: 3, kind: input, shape index: {}]
  %s4 = inlined_call_operand.vmem [shape: f32[24,1], index: 4, kind: input, shape index: {}]
  %s5 = inlined_call_operand.hbm [shape: f32[2,8,256], index: 5, kind: output, shape index: {}]
  %s6 = sld [smem:[#allocation0]]
  $region34: #{tpu_custom_call.1} parent=0
    _
  %s8 = ssub.s32 1, %s6
  %s9 = scalar_select 0, %s8, %s6
  %10 = sst [smem:[#allocation2]] %s0
  $region1: #{tpu_custom_call.1} parent=0
    #allocation3 [shape = 'u8[512]{0}', space=smem, size = 0x200, scoped, tag = 'input window, operand 1, single buffered']
    #allocation4 [shape = 's32[1]{0}', space=sflag, size = 0x4, scoped, tag = 'scoped memory for tpu_custom_call.1']
    #allocation5 [shape = 's32[1]{0}', space=sflag, size = 0x4, scoped, tag = 'scoped memory for tpu_custom_call.1']
    #allocation6 [shape = 'u8[16384]{0}', space=vmem, size = 0x4000, scoped, tag = 'output window, operand 0, single buffered']
    %11 = vsyncpa [#allocation5], 0
    %12 = vsyncpa [#allocation4], 0
    // Predicated region
    $region2: #{tpu_custom_call.1} parent=1 // pred_check
      _
    $region3: #{tpu_custom_call.1} parent=1 // pred_check_branch
      %14 = sbr.rel (0) target = $region5
    $region4: #{tpu_custom_call.1} parent=1 // pred_region
      _
    $region5: #{tpu_custom_call.1} parent=1 // pred_fallthru
      _
    // Predicated region
    $region6: #{tpu_custom_call.1} parent=1 // pred_check
      _
    $region7: #{tpu_custom_call.1} parent=1 // pred_check_branch
      %16 = sbr.rel (0) target = $region9
    $region8: #{tpu_custom_call.1} parent=1 // pred_region
      %18 = vsyncadd [#allocation5], 0
      %s20 = sshll.u32 %s1, 4
      %s21 = int_to_ptr.vmem [resolvable:$true] %s20
      %23 = dma.vmem_to_smem %s21, 16, [#allocation3], [#allocation5]
    $region9: #{tpu_custom_call.1} parent=1 // pred_fallthru
      _
    // Predicated region
    $region10: #{tpu_custom_call.1} parent=1 // pred_check
      _
    $region11: #{tpu_custom_call.1} parent=1 // pred_check_branch
      %25 = sbr.rel (0) target = $region13
    $region12: #{tpu_custom_call.1} parent=1 // pred_region
      _
    $region13: #{tpu_custom_call.1} parent=1 // pred_fallthru
      _
    // Predicated region
    $region14: #{tpu_custom_call.1} parent=1 // pred_check
      _
    $region15: #{tpu_custom_call.1} parent=1 // pred_check_branch
      %27 = sbr.rel (0) target = $region17
    $region16: #{tpu_custom_call.1} parent=1 // pred_region
      _
    $region17: #{tpu_custom_call.1} parent=1 // pred_fallthru
      _
    // Predicated region
    $region18: #{tpu_custom_call.1} parent=1 // pred_check
      _
    $region19: #{tpu_custom_call.1} parent=1 // pred_check_branch
      %29 = sbr.rel (0) target = $region21
    $region20: #{tpu_custom_call.1} parent=1 // pred_region
      _
    $region21: #{tpu_custom_call.1} parent=1 // pred_fallthru
      _
    // Predicated region
    $region22: #{tpu_custom_call.1} parent=1 // pred_check
      _
    $region23: #{tpu_custom_call.1} parent=1 // pred_check_branch
      %31 = sbr.rel (0) target = $region25
    $region24: #{tpu_custom_call.1} parent=1 // pred_region
      %33 = dma.done [#allocation5], 16
    $region25: #{tpu_custom_call.1} parent=1 // pred_fallthru
      _
    %34 = sfence
    %v36 = vld [vmem:[%s3] sm:$0xff]
    %v37 = vld [vmem:[%s3 + $0x8] sm:$0xff]
    %v38 = vld [vmem:[%s3 + $0x10] sm:$0xff]
    %v39 = vld [vmem:[%s4] sm:$0xff]
    %v40 = vld [vmem:[%s4 + $0x8] sm:$0xff]
    %v41 = vld [vmem:[%s4 + $0x10] sm:$0xff]
    %v42 = vld [vmem:[%s2] sm:$0xff]
    %v43 = vld [vmem:[%s2 + $0x8] sm:$0xff]
    %45 = vset.pattern.permute.xlu0 0
    %46 = vperm.xlu0 %45, %v39
    %v47 = vpop.permute.xlu0 %46
    %50 = vset.pattern.permute.xlu0 0
    %51 = vperm.xlu0 %50, %v40
    %v52 = vpop.permute.xlu0 %51
    %55 = vset.pattern.permute.xlu0 0
    %56 = vperm.xlu0 %55, %v41
    %v57 = vpop.permute.xlu0 %56
    %vm59 = vcmask 64512
    %v61 = vsel %vm59, %v36, 0
    %v64 = vsel %vm59, %v37, 0
    %v67 = vsel %vm59, %v38, 0
    %69 = vmatpush.msra.mxu0 0.0
    %70 = vmatpush.msra.mxu0 0.0
    %71 = vmatpush.msra.mxu0 0.0
    %72 = vmatpush.msra.mxu0 0.0
    %73 = vmatpush.msra.mxu0 0.0
    %74 = vmatpush.msra.mxu0 0.0
    %75 = vmatpush.msra.mxu0 0.0
    %76 = vmatpush.msra.mxu0 0.0
    %77 = vmatpush.msra.mxu0 0.0
    %78 = vmatpush.msra.mxu0 0.0
    %79 = vmatpush.msra.mxu0 0.0
    %80 = vmatpush.msra.mxu0 0.0
    %81 = vmatpush.msra.mxu0 0.0
    %82 = vmatpush.msra.mxu0 0.0
    %83 = vmatpush.msra.mxu0 0.0
    %84 = vmatpush.msra.mxu0 %v42
    %85 = vmatmul.f32.gmra.mxu0 %v61
    %v86 = vpop.f32.mrf.mxu0
    %v87 = vadd.f32 %v47, %v86
    %88 = vmatmul.f32.gmra.mxu0 %v64
    %v89 = vpop.f32.mrf.mxu0
    %v90 = vadd.f32 %v52, %v89
    %91 = vmatmul.f32.gmra.mxu0 %v67
    %v92 = vpop.f32.mrf.mxu0
    %v93 = vadd.f32 %v57, %v92
    %94 = vdwg.mxu0
    %95 = vmatpush.msra.mxu0 0.0
    %96 = vmatpush.msra.mxu0 0.0
    %97 = vmatpush.msra.mxu0 0.0
    %98 = vmatpush.msra.mxu0 0.0
    %99 = vmatpush.msra.mxu0 0.0
    %100 = vmatpush.msra.mxu0 0.0
    %101 = vmatpush.msra.mxu0 0.0
    %102 = vmatpush.msra.mxu0 0.0
    %103 = vmatpush.msra.mxu0 0.0
    %104 = vmatpush.msra.mxu0 0.0
    %105 = vmatpush.msra.mxu0 0.0
    %106 = vmatpush.msra.mxu0 0.0
    %107 = vmatpush.msra.mxu0 0.0
    %108 = vmatpush.msra.mxu0 0.0
    %109 = vmatpush.msra.mxu0 0.0
    %110 = vmatpush.msra.mxu0 %v43
    %111 = vmatmul.f32.gmra.mxu0 %v61
    %v112 = vpop.f32.mrf.mxu0
    %v113 = vadd.f32 %v47, %v112
    %114 = vmatmul.f32.gmra.mxu0 %v64
    %v115 = vpop.f32.mrf.mxu0
    %v116 = vadd.f32 %v52, %v115
    %117 = vmatmul.f32.gmra.mxu0 %v67
    %v118 = vpop.f32.mrf.mxu0
    %v119 = vadd.f32 %v57, %v118
    %120 = vdwg.mxu0
    %v121 = vpack.c.bf16 %v113, %v87
    %v122 = vpack.c.bf16 %v116, %v90
    %v123 = vpack.c.bf16 %v119, %v93
    %v124 = vxor.u32 %v121, 2147516416
    %v125 = vxor.u32 %v122, 2147516416
    %v126 = vxor.u32 %v123, 2147516416
    %v127 = vunpack.c.l.bf16 %v124
    %v128 = vunpack.c.h.bf16 %v124
    %v129 = vunpack.c.l.bf16 %v125
    %v130 = vunpack.c.h.bf16 %v125
    %v131 = vunpack.c.l.bf16 %v126
    %v132 = vunpack.c.h.bf16 %v126
    %v133 = vmul.f32 %v127, 1.442695
    %v134 = vpow.pop %v133
    %v135 = vmul.f32 %v128, 1.442695
    %v136 = vpow.pop %v135
    %v137 = vmul.f32 %v129, 1.442695
    %v138 = vpow.pop %v137
    %v139 = vmul.f32 %v130, 1.442695
    %v140 = vpow.pop %v139
    %v141 = vmul.f32 %v131, 1.442695
    %v142 = vpow.pop %v141
    %v143 = vmul.f32 %v132, 1.442695
    %v144 = vpow.pop %v143
    %v145 = vpack.c.bf16 %v136, %v134
    %v146 = vpack.c.bf16 %v140, %v138
    %v147 = vpack.c.bf16 %v144, %v142
    %v148 = vunpack.c.l.bf16 %v145
    %v149 = vunpack.c.h.bf16 %v145
    %v150 = vunpack.c.l.bf16 %v146
    %v151 = vunpack.c.h.bf16 %v146
    %v152 = vunpack.c.l.bf16 %v147
    %v153 = vunpack.c.h.bf16 %v147
    %v154 = vadd.f32 %v148, 1.0
    %v155 = vadd.f32 %v149, 1.0
    %v156 = vadd.f32 %v150, 1.0
    %v157 = vadd.f32 %v151, 1.0
    %v158 = vadd.f32 %v152, 1.0
    %v159 = vadd.f32 %v153, 1.0
    %v160 = vpack.c.bf16 %v155, %v154
    %v161 = vpack.c.bf16 %v157, %v156
    %v162 = vpack.c.bf16 %v159, %v158
    %v163 = vunpack.c.h.bf16 1065369472
    %v164 = vunpack.c.l.bf16 1065369472
    %v165 = vunpack.c.h.bf16 %v160
    %v166 = vunpack.c.l.bf16 %v160
    %v167 = vrcp.pop %v165
    %v168 = vmul.f32 %v163, %v167
    %v169 = vrcp.pop %v166
    %v170 = vmul.f32 %v164, %v169
    %v171 = vpack.c.bf16 %v168, %v170
    %v172 = vunpack.c.h.bf16 %v161
    %v173 = vunpack.c.l.bf16 %v161
    %v174 = vrcp.pop %v172
    %v175 = vmul.f32 %v163, %v174
    %v176 = vrcp.pop %v173
    %v177 = vmul.f32 %v164, %v176
    %v178 = vpack.c.bf16 %v175, %v177
    %v179 = vunpack.c.h.bf16 %v162
    %v180 = vunpack.c.l.bf16 %v162
    %v181 = vrcp.pop %v179
    %v182 = vmul.f32 %v163, %v181
    %v183 = vrcp.pop %v180
    %v184 = vmul.f32 %v164, %v183
    %v185 = vpack.c.bf16 %v182, %v184
    %v186 = vunpack.c.l.bf16 %v171
    %v187 = vunpack.c.h.bf16 %v171
    %v188 = vunpack.c.l.bf16 %v178
    %v189 = vunpack.c.h.bf16 %v178
    %v190 = vunpack.c.l.bf16 %v185
    %v191 = vunpack.c.h.bf16 %v185
    %v192 = vmul.f32 %v186, 13421773.0
    %v193 = vmul.f32 %v187, 13421773.0
    %v194 = vmul.f32 %v188, 13421773.0
    %v195 = vmul.f32 %v189, 13421773.0
    %v196 = vmul.f32 %v190, 13421773.0
    %v197 = vmul.f32 %v191, 13421773.0
    %v198 = vadd.f32 %v192, 3355443.3
    %v199 = vadd.f32 %v193, 3355443.3
    %v200 = vadd.f32 %v194, 3355443.3
    %v201 = vadd.f32 %v195, 3355443.3
    %v202 = vadd.f32 %v196, 3355443.3
    %v203 = vadd.f32 %v197, 3355443.3
    %v204 = vlaneseq
    %v205 = vshrl.u32 %v204, 7
    %v206 = vadd.s32 %v205, 8
    %v207 = vadd.s32 %v205, 16
    %v208 = vlaneseq
    %v209 = vand.u32 %v208, 127
    %v210 = vadd.s32 %v209, 128
    %s211 = smul.u32 0, 48
    %v212 = vstv %s211
    %v213 = vadd.s32 %v212, %v205
    %v214 = vadd.s32 %v212, %v206
    %v215 = vadd.s32 %v212, %v207
    %v216 = vmul.u32 %v213, 256
    %v217 = vmul.u32 %v214, 256
    %v218 = vmul.u32 %v215, 256
    %s219 = smul.u32 0, 256
    %v220 = vstv %s219
    %v221 = vadd.s32 %v216, %v220
    %v222 = vadd.s32 %v217, %v220
    %v223 = vadd.s32 %v218, %v220
    %v224 = vadd.s32 %v221, %v209
    %v225 = vadd.s32 %v221, %v210
    %v226 = vadd.s32 %v222, %v209
    %v227 = vadd.s32 %v222, %v210
    %v228 = vadd.s32 %v223, %v209
    %v229 = vadd.s32 %v223, %v210
    %s230 = sld [smem:[#allocation2]]
    %s231 = smul.u32 %s230, 2654435769
    %v232 = vstv %s231
    %v233 = vxor.u32 %v224, %v232
    %v234 = vxor.u32 %v225, %v232
    %v235 = vxor.u32 %v226, %v232
    %v236 = vxor.u32 %v227, %v232
    %v237 = vxor.u32 %v228, %v232
    %v238 = vxor.u32 %v229, %v232
    %v239 = vshrl.u32 %v233, 16
    %v240 = vshrl.u32 %v234, 16
    %v241 = vshrl.u32 %v235, 16
    %v242 = vshrl.u32 %v236, 16
    %v243 = vshrl.u32 %v237, 16
    %v244 = vshrl.u32 %v238, 16
    %v245 = vxor.u32 %v233, %v239
    %v246 = vxor.u32 %v234, %v240
    %v247 = vxor.u32 %v235, %v241
    %v248 = vxor.u32 %v236, %v242
    %v249 = vxor.u32 %v237, %v243
    %v250 = vxor.u32 %v238, %v244
    %v251 = vmul.u32 %v245, 2146121005
    %v252 = vmul.u32 %v246, 2146121005
    %v253 = vmul.u32 %v247, 2146121005
    %v254 = vmul.u32 %v248, 2146121005
    %v255 = vmul.u32 %v249, 2146121005
    %v256 = vmul.u32 %v250, 2146121005
    %v257 = vshrl.u32 %v251, 15
    %v258 = vshrl.u32 %v252, 15
    %v259 = vshrl.u32 %v253, 15
    %v260 = vshrl.u32 %v254, 15
    %v261 = vshrl.u32 %v255, 15
    %v262 = vshrl.u32 %v256, 15
    %v263 = vxor.u32 %v251, %v257
    %v264 = vxor.u32 %v252, %v258
    %v265 = vxor.u32 %v253, %v259
    %v266 = vxor.u32 %v254, %v260
    %v267 = vxor.u32 %v255, %v261
    %v268 = vxor.u32 %v256, %v262
    %v269 = vmul.u32 %v263, 2221713035
    %v270 = vmul.u32 %v264, 2221713035
    %v271 = vmul.u32 %v265, 2221713035
    %v272 = vmul.u32 %v266, 2221713035
    %v273 = vmul.u32 %v267, 2221713035
    %v274 = vmul.u32 %v268, 2221713035
    %v275 = vshrl.u32 %v269, 16
    %v276 = vshrl.u32 %v270, 16
    %v277 = vshrl.u32 %v271, 16
    %v278 = vshrl.u32 %v272, 16
    %v279 = vshrl.u32 %v273, 16
    %v280 = vshrl.u32 %v274, 16
    %v281 = vxor.u32 %v269, %v275
    %v282 = vxor.u32 %v270, %v276
    %v283 = vxor.u32 %v271, %v277
    %v284 = vxor.u32 %v272, %v278
    %v285 = vxor.u32 %v273, %v279
    %v286 = vxor.u32 %v274, %v280
    %v287 = vshrl.u32 %v281, 8
    %v288 = vshrl.u32 %v282, 8
    %v289 = vshrl.u32 %v283, 8
    %v290 = vshrl.u32 %v284, 8
    %v291 = vshrl.u32 %v285, 8
    %v292 = vshrl.u32 %v286, 8
    %v293 = vshrl.u32 %v287, 16
    %v294 = vand.u32 %v287, 65535
    %v295 = vcvt.s32.f32 %v293
    %v296 = vmul.f32 %v295, 65536.0
    %v297 = vcvt.s32.f32 %v294
    %v298 = vadd.f32 %v296, %v297
    %v299 = vshrl.u32 %v288, 16
    %v300 = vand.u32 %v288, 65535
    %v301 = vcvt.s32.f32 %v299
    %v302 = vmul.f32 %v301, 65536.0
    %v303 = vcvt.s32.f32 %v300
    %v304 = vadd.f32 %v302, %v303
    %v305 = vshrl.u32 %v289, 16
    %v306 = vand.u32 %v289, 65535
    %v307 = vcvt.s32.f32 %v305
    %v308 = vmul.f32 %v307, 65536.0
    %v309 = vcvt.s32.f32 %v306
    %v310 = vadd.f32 %v308, %v309
    %v311 = vshrl.u32 %v290, 16
    %v312 = vand.u32 %v290, 65535
    %v313 = vcvt.s32.f32 %v311
    %v314 = vmul.f32 %v313, 65536.0
    %v315 = vcvt.s32.f32 %v312
    %v316 = vadd.f32 %v314, %v315
    %v317 = vshrl.u32 %v291, 16
    %v318 = vand.u32 %v291, 65535
    %v319 = vcvt.s32.f32 %v317
    %v320 = vmul.f32 %v319, 65536.0
    %v321 = vcvt.s32.f32 %v318
    %v322 = vadd.f32 %v320, %v321
    %v323 = vshrl.u32 %v292, 16
    %v324 = vand.u32 %v292, 65535
    %v325 = vcvt.s32.f32 %v323
    %v326 = vmul.f32 %v325, 65536.0
    %v327 = vcvt.s32.f32 %v324
    %v328 = vadd.f32 %v326, %v327
    %vm329 = vcmp.lt.f32.partialorder %v298, %v198
    %vm330 = vcmp.lt.f32.partialorder %v304, %v199
    %vm331 = vcmp.lt.f32.partialorder %v310, %v200
    %vm332 = vcmp.lt.f32.partialorder %v316, %v201
    %vm333 = vcmp.lt.f32.partialorder %v322, %v202
    %vm334 = vcmp.lt.f32.partialorder %v328, %v203
    %s335 = sld [smem:[#allocation3]]
    %s336 = ssub.f32 1.0, %s335
    %s337 = smul.f32 %s336, 1.25
    %v338 = vstv %s337
    %v339 = vsel %vm329, 1.25, %v338
    %v340 = vsel %vm330, 1.25, %v338
    %v341 = vmul.f32 %v42, %v339
    %v342 = vmul.f32 %v43, %v340
    %s343 = sld [smem:[#allocation3 + $0x1]]
    %s344 = ssub.f32 1.0, %s343
    %v345 = vstv %s344
    %v346 = vsel %vm331, 1.0, %v345
    %v347 = vsel %vm332, 1.0, %v345
    %v348 = vmul.f32 %v341, %v346
    %v349 = vmul.f32 %v342, %v347
    %s350 = sld [smem:[#allocation3 + $0x2]]
    %s351 = ssub.f32 1.0, %s350
    %v352 = vstv %s351
    %v353 = vsel %vm333, 1.0, %v352
    %v354 = vsel %vm334, 1.0, %v352
    %v355 = vmul.f32 %v348, %v353
    %v356 = vmul.f32 %v349, %v354
    %357 = vst [vmem:[#allocation6] sm:$0xff] %v355
    %358 = vst [vmem:[#allocation6 + $0x8] sm:$0xff] %v356
    %s359 = scalar_lea.vmem %s2, 16
    %v360 = vld [vmem:[%s359] sm:$0xff]
    %v361 = vld [vmem:[%s359 + $0x8] sm:$0xff]
    %362 = vmatpush.msra.mxu0 0.0
    %363 = vmatpush.msra.mxu0 0.0
    %364 = vmatpush.msra.mxu0 0.0
    %365 = vmatpush.msra.mxu0 0.0
    %366 = vmatpush.msra.mxu0 0.0
    %367 = vmatpush.msra.mxu0 0.0
    %368 = vmatpush.msra.mxu0 0.0
    %369 = vmatpush.msra.mxu0 0.0
    %370 = vmatpush.msra.mxu0 0.0
    %371 = vmatpush.msra.mxu0 0.0
    %372 = vmatpush.msra.mxu0 0.0
    %373 = vmatpush.msra.mxu0 0.0
    %374 = vmatpush.msra.mxu0 0.0
    %375 = vmatpush.msra.mxu0 0.0
    %376 = vmatpush.msra.mxu0 0.0
    %377 = vmatpush.msra.mxu0 %v360
    %378 = vmatmul.f32.gmra.mxu0 %v61
    %v379 = vpop.f32.mrf.mxu0
    %v380 = vadd.f32 %v47, %v379
    %381 = vmatmul.f32.gmra.mxu0 %v64
    %v382 = vpop.f32.mrf.mxu0
    %v383 = vadd.f32 %v52, %v382
    %384 = vmatmul.f32.gmra.mxu0 %v67
    %v385 = vpop.f32.mrf.mxu0
    %v386 = vadd.f32 %v57, %v385
    %387 = vdwg.mxu0
    %388 = vmatpush.msra.mxu0 0.0
    %389 = vmatpush.msra.mxu0 0.0
    %390 = vmatpush.msra.mxu0 0.0
    %391 = vmatpush.msra.mxu0 0.0
    %392 = vmatpush.msra.mxu0 0.0
    %393 = vmatpush.msra.mxu0 0.0
    %394 = vmatpush.msra.mxu0 0.0
    %395 = vmatpush.msra.mxu0 0.0
    %396 = vmatpush.msra.mxu0 0.0
    %397 = vmatpush.msra.mxu0 0.0
    %398 = vmatpush.msra.mxu0 0.0
    %399 = vmatpush.msra.mxu0 0.0
    %400 = vmatpush.msra.mxu0 0.0
    %401 = vmatpush.msra.mxu0 0.0
    %402 = vmatpush.msra.mxu0 0.0
    %403 = vmatpush.msra.mxu0 %v361
    %404 = vmatmul.f32.gmra.mxu0 %v61
    %v405 = vpop.f32.mrf.mxu0
    %v406 = vadd.f32 %v47, %v405
    %407 = vmatmul.f32.gmra.mxu0 %v64
    %v408 = vpop.f32.mrf.mxu0
    %v409 = vadd.f32 %v52, %v408
    %410 = vmatmul.f32.gmra.mxu0 %v67
    %v411 = vpop.f32.mrf.mxu0
    %v412 = vadd.f32 %v57, %v411
    %413 = vdwg.mxu0
    %v414 = vpack.c.bf16 %v406, %v380
    %v415 = vpack.c.bf16 %v409, %v383
    %v416 = vpack.c.bf16 %v412, %v386
    %v417 = vxor.u32 %v414, 2147516416
    %v418 = vxor.u32 %v415, 2147516416
    %v419 = vxor.u32 %v416, 2147516416
    %v420 = vunpack.c.l.bf16 %v417
    %v421 = vunpack.c.h.bf16 %v417
    %v422 = vunpack.c.l.bf16 %v418
    %v423 = vunpack.c.h.bf16 %v418
    %v424 = vunpack.c.l.bf16 %v419
    %v425 = vunpack.c.h.bf16 %v419
    %v426 = vmul.f32 %v420, 1.442695
    %v427 = vpow.pop %v426
    %v428 = vmul.f32 %v421, 1.442695
    %v429 = vpow.pop %v428
    %v430 = vmul.f32 %v422, 1.442695
    %v431 = vpow.pop %v430
    %v432 = vmul.f32 %v423, 1.442695
    %v433 = vpow.pop %v432
    %v434 = vmul.f32 %v424, 1.442695
    %v435 = vpow.pop %v434
    %v436 = vmul.f32 %v425, 1.442695
    %v437 = vpow.pop %v436
    %v438 = vpack.c.bf16 %v429, %v427
    %v439 = vpack.c.bf16 %v433, %v431
    %v440 = vpack.c.bf16 %v437, %v435
    %v441 = vunpack.c.l.bf16 %v438
    %v442 = vunpack.c.h.bf16 %v438
    %v443 = vunpack.c.l.bf16 %v439
    %v444 = vunpack.c.h.bf16 %v439
    %v445 = vunpack.c.l.bf16 %v440
    %v446 = vunpack.c.h.bf16 %v440
    %v447 = vadd.f32 %v441, 1.0
    %v448 = vadd.f32 %v442, 1.0
    %v449 = vadd.f32 %v443, 1.0
    %v450 = vadd.f32 %v444, 1.0
    %v451 = vadd.f32 %v445, 1.0
    %v452 = vadd.f32 %v446, 1.0
    %v453 = vpack.c.bf16 %v448, %v447
    %v454 = vpack.c.bf16 %v450, %v449
    %v455 = vpack.c.bf16 %v452, %v451
    %v456 = vunpack.c.h.bf16 %v453
    %v457 = vunpack.c.l.bf16 %v453
    %v458 = vrcp.pop %v456
    %v459 = vmul.f32 %v163, %v458
    %v460 = vrcp.pop %v457
    %v461 = vmul.f32 %v164, %v460
    %v462 = vpack.c.bf16 %v459, %v461
    %v463 = vunpack.c.h.bf16 %v454
    %v464 = vunpack.c.l.bf16 %v454
    %v465 = vrcp.pop %v463
    %v466 = vmul.f32 %v163, %v465
    %v467 = vrcp.pop %v464
    %v468 = vmul.f32 %v164, %v467
    %v469 = vpack.c.bf16 %v466, %v468
    %v470 = vunpack.c.h.bf16 %v455
    %v471 = vunpack.c.l.bf16 %v455
    %v472 = vrcp.pop %v470
    %v473 = vmul.f32 %v163, %v472
    %v474 = vrcp.pop %v471
    %v475 = vmul.f32 %v164, %v474
    %v476 = vpack.c.bf16 %v473, %v475
    %v477 = vunpack.c.l.bf16 %v462
    %v478 = vunpack.c.h.bf16 %v462
    %v479 = vunpack.c.l.bf16 %v469
    %v480 = vunpack.c.h.bf16 %v469
    %v481 = vunpack.c.l.bf16 %v476
    %v482 = vunpack.c.h.bf16 %v476
    %v483 = vmul.f32 %v477, 13421773.0
    %v484 = vmul.f32 %v478, 13421773.0
    %v485 = vmul.f32 %v479, 13421773.0
    %v486 = vmul.f32 %v480, 13421773.0
    %v487 = vmul.f32 %v481, 13421773.0
    %v488 = vmul.f32 %v482, 13421773.0
    %v489 = vadd.f32 %v483, 3355443.3
    %v490 = vadd.f32 %v484, 3355443.3
    %v491 = vadd.f32 %v485, 3355443.3
    %v492 = vadd.f32 %v486, 3355443.3
    %v493 = vadd.f32 %v487, 3355443.3
    %v494 = vadd.f32 %v488, 3355443.3
    %s495 = smul.u32 0, 2
    %s496 = sadd.s32 %s495, 1
    %s497 = smul.u32 %s496, 24
    %v498 = vstv %s497
    %v499 = vadd.s32 %v498, %v205
    %v500 = vadd.s32 %v498, %v206
    %v501 = vadd.s32 %v498, %v207
    %v502 = vmul.u32 %v499, 256
    %v503 = vmul.u32 %v500, 256
    %v504 = vmul.u32 %v501, 256
    %v505 = vadd.s32 %v502, %v220
    %v506 = vadd.s32 %v503, %v220
    %v507 = vadd.s32 %v504, %v220
    %v508 = vadd.s32 %v505, %v209
    %v509 = vadd.s32 %v505, %v210
    %v510 = vadd.s32 %v506, %v209
    %v511 = vadd.s32 %v506, %v210
    %v512 = vadd.s32 %v507, %v209
    %v513 = vadd.s32 %v507, %v210
    %s514 = sld [smem:[#allocation2]]
    %s515 = smul.u32 %s514, 2654435769
    %v516 = vstv %s515
    %v517 = vxor.u32 %v508, %v516
    %v518 = vxor.u32 %v509, %v516
    %v519 = vxor.u32 %v510, %v516
    %v520 = vxor.u32 %v511, %v516
    %v521 = vxor.u32 %v512, %v516
    %v522 = vxor.u32 %v513, %v516
    %v523 = vshrl.u32 %v517, 16
    %v524 = vshrl.u32 %v518, 16
    %v525 = vshrl.u32 %v519, 16
    %v526 = vshrl.u32 %v520, 16
    %v527 = vshrl.u32 %v521, 16
    %v528 = vshrl.u32 %v522, 16
    %v529 = vxor.u32 %v517, %v523
    %v530 = vxor.u32 %v518, %v524
    %v531 = vxor.u32 %v519, %v525
    %v532 = vxor.u32 %v520, %v526
    %v533 = vxor.u32 %v521, %v527
    %v534 = vxor.u32 %v522, %v528
    %v535 = vmul.u32 %v529, 2146121005
    %v536 = vmul.u32 %v530, 2146121005
    %v537 = vmul.u32 %v531, 2146121005
    %v538 = vmul.u32 %v532, 2146121005
    %v539 = vmul.u32 %v533, 2146121005
    %v540 = vmul.u32 %v534, 2146121005
    %v541 = vshrl.u32 %v535, 15
    %v542 = vshrl.u32 %v536, 15
    %v543 = vshrl.u32 %v537, 15
    %v544 = vshrl.u32 %v538, 15
    %v545 = vshrl.u32 %v539, 15
    %v546 = vshrl.u32 %v540, 15
    %v547 = vxor.u32 %v535, %v541
    %v548 = vxor.u32 %v536, %v542
    %v549 = vxor.u32 %v537, %v543
    %v550 = vxor.u32 %v538, %v544
    %v551 = vxor.u32 %v539, %v545
    %v552 = vxor.u32 %v540, %v546
    %v553 = vmul.u32 %v547, 2221713035
    %v554 = vmul.u32 %v548, 2221713035
    %v555 = vmul.u32 %v549, 2221713035
    %v556 = vmul.u32 %v550, 2221713035
    %v557 = vmul.u32 %v551, 2221713035
    %v558 = vmul.u32 %v552, 2221713035
    %v559 = vshrl.u32 %v553, 16
    %v560 = vshrl.u32 %v554, 16
    %v561 = vshrl.u32 %v555, 16
    %v562 = vshrl.u32 %v556, 16
    %v563 = vshrl.u32 %v557, 16
    %v564 = vshrl.u32 %v558, 16
    %v565 = vxor.u32 %v553, %v559
    %v566 = vxor.u32 %v554, %v560
    %v567 = vxor.u32 %v555, %v561
    %v568 = vxor.u32 %v556, %v562
    %v569 = vxor.u32 %v557, %v563
    %v570 = vxor.u32 %v558, %v564
    %v571 = vshrl.u32 %v565, 8
    %v572 = vshrl.u32 %v566, 8
    %v573 = vshrl.u32 %v567, 8
    %v574 = vshrl.u32 %v568, 8
    %v575 = vshrl.u32 %v569, 8
    %v576 = vshrl.u32 %v570, 8
    %v577 = vshrl.u32 %v571, 16
    %v578 = vand.u32 %v571, 65535
    %v579 = vcvt.s32.f32 %v577
    %v580 = vmul.f32 %v579, 65536.0
    %v581 = vcvt.s32.f32 %v578
    %v582 = vadd.f32 %v580, %v581
    %v583 = vshrl.u32 %v572, 16
    %v584 = vand.u32 %v572, 65535
    %v585 = vcvt.s32.f32 %v583
    %v586 = vmul.f32 %v585, 65536.0
    %v587 = vcvt.s32.f32 %v584
    %v588 = vadd.f32 %v586, %v587
    %v589 = vshrl.u32 %v573, 16
    %v590 = vand.u32 %v573, 65535
    %v591 = vcvt.s32.f32 %v589
    %v592 = vmul.f32 %v591, 65536.0
    %v593 = vcvt.s32.f32 %v590
    %v594 = vadd.f32 %v592, %v593
    %v595 = vshrl.u32 %v574, 16
    %v596 = vand.u32 %v574, 65535
    %v597 = vcvt.s32.f32 %v595
    %v598 = vmul.f32 %v597, 65536.0
    %v599 = vcvt.s32.f32 %v596
    %v600 = vadd.f32 %v598, %v599
    %v601 = vshrl.u32 %v575, 16
    %v602 = vand.u32 %v575, 65535
    %v603 = vcvt.s32.f32 %v601
    %v604 = vmul.f32 %v603, 65536.0
    %v605 = vcvt.s32.f32 %v602
    %v606 = vadd.f32 %v604, %v605
    %v607 = vshrl.u32 %v576, 16
    %v608 = vand.u32 %v576, 65535
    %v609 = vcvt.s32.f32 %v607
    %v610 = vmul.f32 %v609, 65536.0
    %v611 = vcvt.s32.f32 %v608
    %v612 = vadd.f32 %v610, %v611
    %vm613 = vcmp.lt.f32.partialorder %v582, %v489
    %vm614 = vcmp.lt.f32.partialorder %v588, %v490
    %vm615 = vcmp.lt.f32.partialorder %v594, %v491
    %vm616 = vcmp.lt.f32.partialorder %v600, %v492
    %vm617 = vcmp.lt.f32.partialorder %v606, %v493
    %vm618 = vcmp.lt.f32.partialorder %v612, %v494
    %s619 = sld [smem:[#allocation3]]
    %s620 = ssub.f32 1.0, %s619
    %s621 = smul.f32 %s620, 1.25
    %v622 = vstv %s621
    %v623 = vsel %vm613, 1.25, %v622
    %v624 = vsel %vm614, 1.25, %v622
    %v625 = vmul.f32 %v360, %v623
    %v626 = vmul.f32 %v361, %v624
    %s627 = sld [smem:[#allocation3 + $0x1]]
    %s628 = ssub.f32 1.0, %s627
    %v629 = vstv %s628
    %v630 = vsel %vm615, 1.0, %v629
    %v631 = vsel %vm616, 1.0, %v629
    %v632 = vmul.f32 %v625, %v630
    %v633 = vmul.f32 %v626, %v631
    %s634 = sld [smem:[#allocation3 + $0x2]]
    %s635 = ssub.f32 1.0, %s634
    %v636 = vstv %s635
    %v637 = vsel %vm617, 1.0, %v636
    %v638 = vsel %vm618, 1.0, %v636
    %v639 = vmul.f32 %v632, %v637
    %v640 = vmul.f32 %v633, %v638
    %s641 = scalar_lea.vmem [#allocation6], 16
    %642 = vst [vmem:[%s641] sm:$0xff] %v639
    %643 = vst [vmem:[%s641 + $0x8] sm:$0xff] %v640
    // Predicated region
    $region26: #{tpu_custom_call.1} parent=1 // pred_check
      _
    $region27: #{tpu_custom_call.1} parent=1 // pred_check_branch
      %645 = sbr.rel (0) target = $region29
    $region28: #{tpu_custom_call.1} parent=1 // pred_region
      %647 = vsyncadd [#allocation4], 0
      %s648 = sshll.u32 [#allocation6], 4
      %s649 = int_to_ptr.vmem [resolvable:$true] %s648
      %s650 = sshll.u32 %s5, 4
      %s651 = int_to_ptr.hbm [resolvable:$true] %s650
      %656 = dma.vmem_to_hbm [thread:$0]  %s649, 512, %s651, [#allocation4], 256, 256, 16
    $region29: #{tpu_custom_call.1} parent=1 // pred_fallthru
      _
    // Predicated region
    $region30: #{tpu_custom_call.1} parent=1 // pred_check
      _
    $region31: #{tpu_custom_call.1} parent=1 // pred_check_branch
      %658 = sbr.rel (0) target = $region33
    $region32: #{tpu_custom_call.1} parent=1 // pred_region
      %660 = dma.done [#allocation4], 512
    $region33: #{tpu_custom_call.1} parent=1 // pred_fallthru
      _
    %661 = vsyncpa [#allocation4], 1
    %662 = vsyncpa [#allocation5], 1

</llo_original>
